<compile_context>
chip_gen: v6e
topology: v6e:2x2x1
jax: 0.10.0
libtpu: 0.0.40
codegen_flags: <defaults>
</compile_context>

<pallas_src>
import jax
import jax.numpy as jnp
from jax.experimental import pallas as pl
from jax.experimental.pallas import tpu as pltpu


# ---------------------------------------------------------------------------
# Primary path: zero-copy aliased identity (no HBM<->VMEM traffic at all).
# ---------------------------------------------------------------------------
def _alias_identity_kernel(x_ref, o_ref):
    # Output aliases the input buffer; no data movement is needed. touch()
    # keeps a read+write dependency on the aliased output so nothing gets
    # reordered around the (otherwise empty) kernel body.
    del x_ref
    pltpu.touch(o_ref)


def _identity_zero_copy(x):
    return pl.pallas_call(
        _alias_identity_kernel,
        out_shape=jax.ShapeDtypeStruct(x.shape, x.dtype),
        in_specs=[pl.BlockSpec(memory_space=pl.ANY)],
        out_specs=pl.BlockSpec(memory_space=pl.ANY),
        input_output_aliases={0: 0},  # output IS the input buffer (or XLA's copy of it)
        cost_estimate=pl.CostEstimate(flops=0, transcendentals=0, bytes_accessed=0),
    )(x)


_ZERO_COPY_OK = None  # lazily resolved capability/correctness flag


def _zero_copy_supported():
    """One-time probe: the zero-copy path must compile AND be bit-exact even
    with a non-donated operand (XLA must populate the aliased output)."""
    global _ZERO_COPY_OK
    if _ZERO_COPY_OK is None:
        try:
            # Deliberately ragged, 3-D probe: hardest layout case for this path.
            probe = jnp.arange(3 * 5 * 7, dtype=jnp.float32).reshape(3, 5, 7)
            got = jax.block_until_ready(_identity_zero_copy(probe))
            _ZERO_COPY_OK = bool(jnp.array_equal(got, probe))
        except Exception:
            _ZERO_COPY_OK = False
    return _ZERO_COPY_OK


# ---------------------------------------------------------------------------
# Fallback path: lane-dense tiled VMEM copy (only used if zero-copy is
# unavailable on the current backend).
# ---------------------------------------------------------------------------
_ROW_BLOCK = 2048  # (2048, 128) f32 tile = 1 MiB/buffer; ~4 MiB with in+out double-buffered


def _copy_kernel(x_ref, o_ref):
    o_ref[...] = x_ref[...]


def _tiled_copy_2d(flat):
    rows, cols = flat.shape  # cols == 128 (lane-dense)
    rb = rows if rows <= _ROW_BLOCK else _ROW_BLOCK
    nbytes = flat.size * flat.dtype.itemsize
    return pl.pallas_call(
        _copy_kernel,
        out_shape=jax.ShapeDtypeStruct(flat.shape, flat.dtype),
        grid=(pl.cdiv(rows, rb),),
        in_specs=[pl.BlockSpec((rb, cols), lambda i: (i, 0))],
        out_specs=pl.BlockSpec((rb, cols), lambda i: (i, 0)),
        input_output_aliases={0: 0},
        compiler_params=pltpu.CompilerParams(
            # "parallel": lets v7x shard the copy across its 2 TensorCores;
            # measured neutral on the single-core v5e/v6e.
            dimension_semantics=("parallel",),
        ),
        cost_estimate=pl.CostEstimate(
            flops=0, transcendentals=0, bytes_accessed=2 * nbytes),
    )(flat)


def _identity_tiled_copy(x):
    orig_shape = x.shape
    n = x.size
    if n % 128 == 0:
        out = _tiled_copy_2d(x.reshape(n // 128, 128))
        return out.reshape(orig_shape)
    # Ragged size: pad to a multiple of 1024 elements so the slab is lane-dense
    # and sublane-full (unmasked vld/vst), copy, then slice back.
    pad = (-n) % 1024
    flat = jnp.pad(x.reshape(-1), (0, pad)).reshape(-1, 128)
    out = _tiled_copy_2d(flat)
    return out.reshape(-1)[:n].reshape(orig_shape)


# ---------------------------------------------------------------------------
# Public forward (matches pre_sync_module.forward: identity).
# ---------------------------------------------------------------------------
def pre_sync_module_forward(hidden_states, params=None):
    """Pallas equivalent of pre_sync_module.forward (identity).

    `params` (the unused Linear(1,1) weight/bias) is accepted for API parity
    but, matching the PyTorch forward, is never applied.
    """
    del params  # unused, exactly as in the PyTorch module's forward
    if _zero_copy_supported():
        return _identity_zero_copy(hidden_states)
    return _identity_tiled_copy(hidden_states)


def init_params(key):
    """Deterministic init for the unused nn.Linear(1, 1) (weight: [1,1], bias: [1])."""
    kw, kb = jax.random.split(key)
    weight = jax.random.uniform(kw, (1, 1), jnp.float32, -1.0, 1.0)
    bias = jax.random.uniform(kb, (1,), jnp.float32, -1.0, 1.0)
    return {"linear_weight": weight, "linear_bias": bias}


if __name__ == "__main__":
    key = jax.random.PRNGKey(0)
    k_params, k_x, k_odd = jax.random.split(key, 3)

    params = init_params(k_params)  # present for parity; unused in forward

    # Small shapes consistent with a "hidden_states" tensor.
    batch, seq, hidden = 2, 8, 32
    hidden_states = jax.random.normal(k_x, (batch, seq, hidden), jnp.float32)

    out = pre_sync_module_forward(hidden_states, params)
    out = jax.block_until_ready(out)

    assert out.shape == hidden_states.shape
    assert out.dtype == hidden_states.dtype
    assert bool(jnp.array_equal(out, hidden_states))

    # Also exercise a ragged, non-128-multiple shape (identity must be bit-exact).
    odd = jax.random.normal(k_odd, (3, 5, 7), jnp.float32)
    odd_out = jax.block_until_ready(pre_sync_module_forward(odd, params))
    assert odd_out.shape == odd.shape
    assert bool(jnp.array_equal(odd_out, odd))

    print("KERNEL_OK")
</pallas_src>

<mosaic_0001>
module attributes {stable_mosaic.version = 11 : i64} {
  func.func @_alias_identity_kernel(%arg0: memref<3x5x7xf32, #tpu.memory_space<any>>, %arg1: memref<3x5x7xf32, #tpu.memory_space<any>>) attributes {dimension_semantics = [], scalar_prefetch = 0 : i64, scratch_operands = 0 : i64, tpu.core_type = #tpu.core_type<tc>} {
    return
  }
}

module attributes {stable_mosaic.version = 11 : i64} {
  func.func @_copy_kernel(%arg0: i32, %arg1: memref<4x128xf32, #tpu.memory_space<vmem>>, %arg2: memref<4x128xf32, #tpu.memory_space<vmem>>) attributes {dimension_semantics = [#tpu.dimension_semantics<parallel>], iteration_bounds = array<i64: 1>, scalar_prefetch = 0 : i64, scratch_operands = 0 : i64, tpu.core_type = #tpu.core_type<tc>, window_params = [{transform_indices = @transform_0, window_bounds = array<i64: 4, 128>}, {transform_indices = @transform_1, window_bounds = array<i64: 4, 128>}]} {
    %c0 = arith.constant 0 : index
    %c0_0 = arith.constant 0 : index
    %0 = vector.load %arg1[%c0, %c0_0] : memref<4x128xf32, #tpu.memory_space<vmem>>, vector<4x128xf32>
    %c0_1 = arith.constant 0 : index
    %c0_2 = arith.constant 0 : index
    %1 = vector.load %arg2[%c0_1, %c0_2] : memref<4x128xf32, #tpu.memory_space<vmem>>, vector<4x128xf32>
    tpu.vector_store %arg2[%c0_1, %c0_2], %0 {strides = array<i32>} : memref<4x128xf32, #tpu.memory_space<vmem>>, vector<4x128xf32>,
    return
  }
  func.func @transform_0(%arg0: i32) -> (i32, i32) {
    %c0_i32 = arith.constant 0 : i32
    %c0_i32_0 = arith.constant 0 : i32
    return %arg0, %c0_i32 : i32, i32
  }
  func.func @transform_1(%arg0: i32) -> (i32, i32) {
    %c0_i32 = arith.constant 0 : i32
    %c0_i32_0 = arith.constant 0 : i32
    return %arg0, %c0_i32 : i32, i32
  }
}

</mosaic_0001>

<llo_original>
// kernel: tpu_custom_call.1
$region0: #{tpu_custom_call.1}
  #allocation0 [shape = 'u32[]', space=smem, size = 0x4, offset = 0x4, fixed_abs, tag = 'smem constant byte address 0x4 - core index']
  #allocation1 [shape = 'u32[144,128]{1,0:T(1,128)}', space=vmem, size = 0x12000, scoped, tag = 'internal scratch']
  %s0 = inlined_call_operand.vmem [shape: f32[3,5,7], index: 0, kind: input, shape index: {}, may-alias: {0,1}]
  %s1 = inlined_call_operand.vmem [shape: f32[3,5,7], index: 1, kind: output, shape index: {}, may-alias: {0,1}]
  %s2 = sld [smem:[#allocation0]]
  $region2: #{tpu_custom_call.1} parent=0
    _
  %s4 = ssub.s32 1, %s2
  %s5 = scalar_select 0, %s4, %s2

// kernel: tpu_custom_call.1
$region0: #{tpu_custom_call.1}
  #allocation0 [shape = 'u32[]', space=smem, size = 0x4, offset = 0x4, fixed_abs, tag = 'smem constant byte address 0x4 - core index']
  #allocation1 [shape = 'u32[144,128]{1,0:T(1,128)}', space=vmem, size = 0x12000, scoped, tag = 'internal scratch']
  %s0 = inlined_call_operand.hbm [shape: f32[4,128], index: 0, kind: input, shape index: {}, may-alias: {0,1}]
  %s1 = inlined_call_operand.hbm [shape: f32[4,128], index: 1, kind: output, shape index: {}, may-alias: {0,1}]
  %s2 = sld [smem:[#allocation0]]
  $region18: #{tpu_custom_call.1} parent=0
    _
  %s4 = ssub.s32 1, %s2
  %s5 = scalar_select 0, %s4, %s2
  $region1: #{tpu_custom_call.1} parent=0
    #allocation2 [shape = 'u8[2048]{0}', space=vmem, size = 0x800, scoped, tag = 'input window, operand 0, single buffered']
    #allocation3 [shape = 's32[1]{0}', space=sflag, size = 0x4, scoped, tag = 'scoped memory for tpu_custom_call.1']
    #allocation4 [shape = 's32[1]{0}', space=sflag, size = 0x4, scoped, tag = 'scoped memory for tpu_custom_call.1']
    #allocation5 [shape = 'u8[2048]{0}', space=vmem, size = 0x800, scoped, tag = 'output window, operand 0, single buffered']
    %6 = vsyncpa [#allocation3], 0
    %7 = vsyncpa [#allocation4], 0
    // Predicated region
    $region2: #{tpu_custom_call.1} parent=1 // pred_check
      _
    $region3: #{tpu_custom_call.1} parent=1 // pred_check_branch
      %9 = sbr.rel (0) target = $region5
    $region4: #{tpu_custom_call.1} parent=1 // pred_region
      %s11 = ssub.s32 64, 64
      %12 = vsyncadd [#allocation3], %s11
      %s14 = sshll.u32 [#allocation2], 4
      %s15 = int_to_ptr.vmem [resolvable:$true] %s14
      %17 = dma.hbm_to_vmem [thread:$0]  %s0, 64, %s15, [#allocation3]
    $region5: #{tpu_custom_call.1} parent=1 // pred_fallthru
      _
    // Predicated region
    $region6: #{tpu_custom_call.1} parent=1 // pred_check
      _
    $region7: #{tpu_custom_call.1} parent=1 // pred_check_branch
      %19 = sbr.rel (0) target = $region9
    $region8: #{tpu_custom_call.1} parent=1 // pred_region
      %20 = dma.done [#allocation3], 64
    $region9: #{tpu_custom_call.1} parent=1 // pred_fallthru
      _
    %v21 = vld [vmem:[#allocation2] sm:$0xf]
    %22 = vst [vmem:[#allocation5] sm:$0xf] %v21
    // Predicated region
    $region10: #{tpu_custom_call.1} parent=1 // pred_check
      _
    $region11: #{tpu_custom_call.1} parent=1 // pred_check_branch
      %24 = sbr.rel (0) target = $region13
    $region12: #{tpu_custom_call.1} parent=1 // pred_region
      %s26 = ssub.s32 64, 64
      %27 = vsyncadd [#allocation4], %s26
      %s29 = sshll.u32 [#allocation5], 4
      %s30 = int_to_ptr.vmem [resolvable:$true] %s29
      %32 = dma.vmem_to_hbm [thread:$0]  %s30, 64, %s1, [#allocation4]
    $region13: #{tpu_custom_call.1} parent=1 // pred_fallthru
      _
    // Predicated region
    $region14: #{tpu_custom_call.1} parent=1 // pred_check
      _
    $region15: #{tpu_custom_call.1} parent=1 // pred_check_branch
      %34 = sbr.rel (0) target = $region17
    $region16: #{tpu_custom_call.1} parent=1 // pred_region
      %35 = dma.done [#allocation4], 64
    $region17: #{tpu_custom_call.1} parent=1 // pred_fallthru
      _
    %36 = vsyncpa [#allocation3], 1
    %37 = vsyncpa [#allocation4], 1

</llo_original>
